<compile_context>
chip_gen: v6e
topology: v6e:2x2x1
jax: 0.10.0
libtpu: 0.0.40
codegen_flags: <defaults>
</compile_context>

<pallas_src>
import functools

import jax
import jax.numpy as jnp
from jax.experimental import pallas as pl
from jax.experimental.pallas import tpu as pltpu

BN_EPS = 1e-5
LANE = 128
SUBLANE = 8


def _round_up(n, m):
    return (n + m - 1) // m * m


def _full_spec(shape):
    # Whole-array block (block_shape == array shape is always legal on TPU).
    return pl.BlockSpec(shape, lambda: (0,) * len(shape))


# ---------------------------------------------------------------------------
# Fused kernel: all hidden blocks (Linear->ReLU->BatchNorm) + optional head.
# ---------------------------------------------------------------------------
def _make_mlp_kernel(num_hidden, batch_real, has_head):
    inv_b = 1.0 / float(batch_real)

    def kernel(x_ref, w_ref, p_ref, o_ref):
        h = x_ref[...]                                          # [B_pad, F] f32
        b_pad = h.shape[0]

        # Mask selecting the real batch rows -> padding never pollutes BN stats.
        row_ids = jax.lax.broadcasted_iota(jnp.int32, (b_pad, 1), 0)
        row_mask = (row_ids < batch_real).astype(jnp.float32)   # [B_pad, 1]

        for l in range(num_hidden):
            w = w_ref[l]                                        # [F, F] bf16, [In, Out]
            bias = p_ref[3 * l + 0: 3 * l + 1, :]               # [1, F]
            gamma = p_ref[3 * l + 1: 3 * l + 2, :]
            beta = p_ref[3 * l + 2: 3 * l + 3, :]

            # Linear (bf16 in, f32 accumulate on MXU) + ReLU, lane-dense output.
            z = jnp.dot(h.astype(jnp.bfloat16), w,
                        preferred_element_type=jnp.float32) + bias
            z = jnp.maximum(z, 0.0)

            # BatchNorm1d, training-mode batch statistics (biased variance).
            zm = z * row_mask
            mean = jnp.sum(zm, axis=0, keepdims=True) * inv_b
            diff = (z - mean) * row_mask
            var = jnp.sum(diff * diff, axis=0, keepdims=True) * inv_b
            h = (z - mean) * jax.lax.rsqrt(var + BN_EPS) * gamma + beta

        if has_head:
            head_bias = p_ref[3 * num_hidden: 3 * num_hidden + 1, :]
            h = jnp.dot(h.astype(jnp.bfloat16), w_ref[num_hidden],
                        preferred_element_type=jnp.float32) + head_bias

        o_ref[...] = h

    return kernel


def _mlp_pallas(x_pad, w_all, p_all, *, num_hidden, batch_real, has_head):
    b_pad, f_pad = x_pad.shape
    kernel = _make_mlp_kernel(num_hidden, batch_real, has_head)
    return pl.pallas_call(
        kernel,
        out_shape=jax.ShapeDtypeStruct((b_pad, f_pad), jnp.float32),
        grid=(),
        in_specs=[_full_spec(x_pad.shape),
                  _full_spec(w_all.shape),
                  _full_spec(p_all.shape)],
        out_specs=_full_spec((b_pad, f_pad)),
        compiler_params=pltpu.CompilerParams(vmem_limit_bytes=32 * 1024 * 1024),
    )(x_pad, w_all, p_all)


# ---------------------------------------------------------------------------
# Parameter construction (deterministic, mimics PyTorch init; PyTorch layout)
# ---------------------------------------------------------------------------
def _kaiming_normal(key, out_f, in_f):
    std = (2.0 / in_f) ** 0.5
    return std * jax.random.normal(key, (out_f, in_f), dtype=jnp.float32)


def _linear_bias(key, out_f, in_f):
    bound = 1.0 / (in_f ** 0.5)
    return jax.random.uniform(key, (1, out_f), dtype=jnp.float32,
                              minval=-bound, maxval=bound)


def init_mlp_vanilla_params(key, in_features, num_nodes, out_features):
    dims = [in_features] + list(num_nodes)
    params = {"blocks": [], "head": None}
    for n_in, n_out in zip(dims[:-1], dims[1:]):
        key, kw, kb = jax.random.split(key, 3)
        params["blocks"].append(dict(
            w=_kaiming_normal(kw, n_out, n_in),
            b=_linear_bias(kb, n_out, n_in),
            gamma=jnp.ones((1, n_out), jnp.float32),
            beta=jnp.zeros((1, n_out), jnp.float32),
        ))
    if out_features:
        key, kw, kb = jax.random.split(key, 3)
        n_in = dims[-1]
        bound = 1.0 / (n_in ** 0.5)
        w_out = jax.random.uniform(kw, (out_features, n_in), dtype=jnp.float32,
                                   minval=-bound, maxval=bound)
        b_out = _linear_bias(kb, out_features, n_in)
        params["head"] = dict(w=w_out, b=b_out)
    return params


def pack_params(params):
    """Pre-transpose/pad weights to lane-dense [In, Out] slabs, stack layers,
    and pack bias/gamma/beta/head-bias into a single [3L+1, F_pad] array."""
    blocks = params["blocks"]
    head = params["head"]
    widths = [blocks[0]["w"].shape[1]] + [b["w"].shape[0] for b in blocks]
    if head is not None:
        widths.append(head["w"].shape[0])
    f_pad = _round_up(max(widths), LANE)

    def pad_w(w):  # [out, in] torch layout -> [in, out], padded, bf16
        wt = w.T
        pw = jnp.zeros((f_pad, f_pad), jnp.float32)
        pw = pw.at[:wt.shape[0], :wt.shape[1]].set(wt)
        return pw.astype(jnp.bfloat16)

    def pad_row(v):  # [1, n] -> [1, f_pad]
        return jnp.zeros((1, f_pad), jnp.float32).at[:, :v.shape[1]].set(v)

    w_list, p_rows = [], []
    for blk in blocks:
        w_list.append(pad_w(blk["w"]))
        p_rows += [pad_row(blk["b"]), pad_row(blk["gamma"]), pad_row(blk["beta"])]
    if head is not None:
        w_list.append(pad_w(head["w"]))
        p_rows.append(pad_row(head["b"]))
    else:
        p_rows.append(jnp.zeros((1, f_pad), jnp.float32))

    packed = {
        "w_all": jnp.stack(w_list, axis=0),        # [L(+1), F_pad, F_pad] bf16
        "p_all": jnp.concatenate(p_rows, axis=0),  # [3L+1, F_pad] f32
    }
    meta = {
        "num_hidden": len(blocks),
        "has_head": head is not None,
        "in_features": blocks[0]["w"].shape[1],
        "out_features": (head["w"].shape[0] if head is not None
                         else blocks[-1]["w"].shape[0]),
        "f_pad": f_pad,
    }
    return packed, meta


@functools.partial(jax.jit, static_argnames=("num_hidden", "has_head",
                                             "in_features", "out_features",
                                             "f_pad"))
def mlp_vanilla_forward(packed, x, *, num_hidden, has_head, in_features,
                        out_features, f_pad):
    b = x.shape[0]
    b_pad = max(_round_up(b, SUBLANE), SUBLANE)
    x_pad = jnp.zeros((b_pad, f_pad), jnp.float32)
    x_pad = x_pad.at[:b, :in_features].set(x.astype(jnp.float32))
    y_pad = _mlp_pallas(x_pad, packed["w_all"], packed["p_all"],
                        num_hidden=num_hidden, batch_real=b, has_head=has_head)
    return y_pad[:b, :out_features]


# ---------------------------------------------------------------------------
# Pure-JAX reference (same math / same bf16 matmul inputs) for verification.
# ---------------------------------------------------------------------------
def mlp_reference(params, x):
    h = x.astype(jnp.float32)
    for blk in params["blocks"]:
        z = jnp.dot(h.astype(jnp.bfloat16), blk["w"].T.astype(jnp.bfloat16),
                    preferred_element_type=jnp.float32) + blk["b"]
        z = jnp.maximum(z, 0.0)
        mean = jnp.mean(z, axis=0, keepdims=True)
        var = jnp.mean((z - mean) ** 2, axis=0, keepdims=True)
        h = (z - mean) * jax.lax.rsqrt(var + BN_EPS) * blk["gamma"] + blk["beta"]
    if params["head"] is not None:
        h = jnp.dot(h.astype(jnp.bfloat16),
                    params["head"]["w"].T.astype(jnp.bfloat16),
                    preferred_element_type=jnp.float32) + params["head"]["b"]
    return h


if __name__ == "__main__":
    key = jax.random.PRNGKey(0)
    k_params, k_x = jax.random.split(key)

    in_features = 16
    num_nodes = [32, 32]
    out_features = 1
    batch = 8

    params = init_mlp_vanilla_params(k_params, in_features, num_nodes, out_features)
    packed, meta = pack_params(params)
    x = jax.random.normal(k_x, (batch, in_features), dtype=jnp.float32)

    y = mlp_vanilla_forward(packed, x, **meta)
    jax.block_until_ready(y)

    y_ref = mlp_reference(params, x)

    assert y.shape == (batch, out_features), y.shape
    assert bool(jnp.all(jnp.isfinite(y)))
    assert bool(jnp.allclose(y, y_ref, rtol=2e-2, atol=2e-2)), (y, y_ref)
    print("KERNEL_OK")
</pallas_src>

<mosaic_0001>
module attributes {stable_mosaic.version = 11 : i64} {
  func.func @kernel(%arg0: memref<8x128xf32, #tpu.memory_space<vmem>>, %arg1: memref<3x128x128xbf16, #tpu.memory_space<vmem>>, %arg2: memref<7x128xf32, #tpu.memory_space<vmem>>, %arg3: memref<8x128xf32, #tpu.memory_space<vmem>>) attributes {dimension_semantics = [], scalar_prefetch = 0 : i64, scratch_operands = 0 : i64, tpu.core_type = #tpu.core_type<tc>} {
    %c0 = arith.constant 0 : index
    %c0_0 = arith.constant 0 : index
    %0 = vector.load %arg0[%c0, %c0_0] : memref<8x128xf32, #tpu.memory_space<vmem>>, vector<8x128xf32>
    %1 = tpu.iota {dimensions = array<i32: 0>} : vector<8x1xi32>
    %c8_i32 = arith.constant 8 : i32
    %2 = vector.broadcast %c8_i32 : i32 to vector<8x1xi32>
    %3 = arith.cmpi slt, %1, %2 : vector<8x1xi32>
    %4 = arith.extui %3 : vector<8x1xi1> to vector<8x1xi32>
    %5 = arith.sitofp %4 : vector<8x1xi32> to vector<8x1xf32>
    %c0_1 = arith.constant 0 : index
    %c0_2 = arith.constant 0 : index
    %c0_3 = arith.constant 0 : index
    %6 = vector.load %arg1[%c0_1, %c0_2, %c0_3] : memref<3x128x128xbf16, #tpu.memory_space<vmem>>, vector<1x128x128xbf16>
    %7 = vector.shape_cast %6 : vector<1x128x128xbf16> to vector<128x128xbf16>
    %c0_4 = arith.constant 0 : index
    %c0_5 = arith.constant 0 : index
    %8 = vector.load %arg2[%c0_4, %c0_5] : memref<7x128xf32, #tpu.memory_space<vmem>>, vector<1x128xf32>
    %c1 = arith.constant 1 : index
    %c0_6 = arith.constant 0 : index
    %9 = vector.load %arg2[%c1, %c0_6] : memref<7x128xf32, #tpu.memory_space<vmem>>, vector<1x128xf32>
    %c2 = arith.constant 2 : index
    %c0_7 = arith.constant 0 : index
    %10 = vector.load %arg2[%c2, %c0_7] : memref<7x128xf32, #tpu.memory_space<vmem>>, vector<1x128xf32>
    %11 = arith.truncf %0 : vector<8x128xf32> to vector<8x128xbf16>
    %cst = arith.constant dense<0.000000e+00> : vector<8x128xf32>
    %12 = tpu.matmul %11, %7, %cst {dimension_numbers = #tpu.dot_dimension_numbers<[1], [0], [0], [1], [0, 0, 1, 1], [], []>} : vector<8x128xbf16>, vector<128x128xbf16>, vector<8x128xf32> -> vector<8x128xf32>
    %13 = vector.broadcast %8 : vector<1x128xf32> to vector<8x128xf32>
    %14 = arith.addf %12, %13 : vector<8x128xf32>
    %cst_8 = arith.constant 0.000000e+00 : f32
    %15 = vector.broadcast %cst_8 : f32 to vector<8x128xf32>
    %16 = arith.maximumf %14, %15 : vector<8x128xf32>
    %17 = vector.broadcast %5 : vector<8x1xf32> to vector<8x128xf32>
    %18 = arith.mulf %16, %17 : vector<8x128xf32>
    %cst_9 = arith.constant dense<0.000000e+00> : vector<128xf32>
    %19 = vector.multi_reduction <add>, %18, %cst_9 [0] : vector<8x128xf32> to vector<128xf32>
    %20 = vector.shape_cast %19 : vector<128xf32> to vector<1x128xf32>
    %cst_10 = arith.constant 1.250000e-01 : f32
    %21 = vector.broadcast %cst_10 : f32 to vector<1x128xf32>
    %22 = arith.mulf %20, %21 : vector<1x128xf32>
    %23 = vector.broadcast %22 : vector<1x128xf32> to vector<8x128xf32>
    %24 = arith.subf %16, %23 : vector<8x128xf32>
    %25 = vector.broadcast %5 : vector<8x1xf32> to vector<8x128xf32>
    %26 = arith.mulf %24, %25 : vector<8x128xf32>
    %27 = arith.mulf %26, %26 : vector<8x128xf32>
    %cst_11 = arith.constant dense<0.000000e+00> : vector<128xf32>
    %28 = vector.multi_reduction <add>, %27, %cst_11 [0] : vector<8x128xf32> to vector<128xf32>
    %29 = vector.shape_cast %28 : vector<128xf32> to vector<1x128xf32>
    %cst_12 = arith.constant 1.250000e-01 : f32
    %30 = vector.broadcast %cst_12 : f32 to vector<1x128xf32>
    %31 = arith.mulf %29, %30 : vector<1x128xf32>
    %32 = vector.broadcast %22 : vector<1x128xf32> to vector<8x128xf32>
    %33 = arith.subf %16, %32 : vector<8x128xf32>
    %cst_13 = arith.constant 9.99999974E-6 : f32
    %34 = vector.broadcast %cst_13 : f32 to vector<1x128xf32>
    %35 = arith.addf %31, %34 : vector<1x128xf32>
    %36 = math.rsqrt %35 : vector<1x128xf32>
    %37 = vector.broadcast %36 : vector<1x128xf32> to vector<8x128xf32>
    %38 = arith.mulf %33, %37 : vector<8x128xf32>
    %39 = vector.broadcast %9 : vector<1x128xf32> to vector<8x128xf32>
    %40 = arith.mulf %38, %39 : vector<8x128xf32>
    %41 = vector.broadcast %10 : vector<1x128xf32> to vector<8x128xf32>
    %42 = arith.addf %40, %41 : vector<8x128xf32>
    %c1_14 = arith.constant 1 : index
    %c0_15 = arith.constant 0 : index
    %c0_16 = arith.constant 0 : index
    %43 = vector.load %arg1[%c1_14, %c0_15, %c0_16] : memref<3x128x128xbf16, #tpu.memory_space<vmem>>, vector<1x128x128xbf16>
    %44 = vector.shape_cast %43 : vector<1x128x128xbf16> to vector<128x128xbf16>
    %c3 = arith.constant 3 : index
    %c0_17 = arith.constant 0 : index
    %45 = vector.load %arg2[%c3, %c0_17] : memref<7x128xf32, #tpu.memory_space<vmem>>, vector<1x128xf32>
    %c4 = arith.constant 4 : index
    %c0_18 = arith.constant 0 : index
    %46 = vector.load %arg2[%c4, %c0_18] : memref<7x128xf32, #tpu.memory_space<vmem>>, vector<1x128xf32>
    %c5 = arith.constant 5 : index
    %c0_19 = arith.constant 0 : index
    %47 = vector.load %arg2[%c5, %c0_19] : memref<7x128xf32, #tpu.memory_space<vmem>>, vector<1x128xf32>
    %48 = arith.truncf %42 : vector<8x128xf32> to vector<8x128xbf16>
    %cst_20 = arith.constant dense<0.000000e+00> : vector<8x128xf32>
    %49 = tpu.matmul %48, %44, %cst_20 {dimension_numbers = #tpu.dot_dimension_numbers<[1], [0], [0], [1], [0, 0, 1, 1], [], []>} : vector<8x128xbf16>, vector<128x128xbf16>, vector<8x128xf32> -> vector<8x128xf32>
    %50 = vector.broadcast %45 : vector<1x128xf32> to vector<8x128xf32>
    %51 = arith.addf %49, %50 : vector<8x128xf32>
    %cst_21 = arith.constant 0.000000e+00 : f32
    %52 = vector.broadcast %cst_21 : f32 to vector<8x128xf32>
    %53 = arith.maximumf %51, %52 : vector<8x128xf32>
    %54 = vector.broadcast %5 : vector<8x1xf32> to vector<8x128xf32>
    %55 = arith.mulf %53, %54 : vector<8x128xf32>
    %cst_22 = arith.constant dense<0.000000e+00> : vector<128xf32>
    %56 = vector.multi_reduction <add>, %55, %cst_22 [0] : vector<8x128xf32> to vector<128xf32>
    %57 = vector.shape_cast %56 : vector<128xf32> to vector<1x128xf32>
    %cst_23 = arith.constant 1.250000e-01 : f32
    %58 = vector.broadcast %cst_23 : f32 to vector<1x128xf32>
    %59 = arith.mulf %57, %58 : vector<1x128xf32>
    %60 = vector.broadcast %59 : vector<1x128xf32> to vector<8x128xf32>
    %61 = arith.subf %53, %60 : vector<8x128xf32>
    %62 = vector.broadcast %5 : vector<8x1xf32> to vector<8x128xf32>
    %63 = arith.mulf %61, %62 : vector<8x128xf32>
    %64 = arith.mulf %63, %63 : vector<8x128xf32>
    %cst_24 = arith.constant dense<0.000000e+00> : vector<128xf32>
    %65 = vector.multi_reduction <add>, %64, %cst_24 [0] : vector<8x128xf32> to vector<128xf32>
    %66 = vector.shape_cast %65 : vector<128xf32> to vector<1x128xf32>
    %cst_25 = arith.constant 1.250000e-01 : f32
    %67 = vector.broadcast %cst_25 : f32 to vector<1x128xf32>
    %68 = arith.mulf %66, %67 : vector<1x128xf32>
    %69 = vector.broadcast %59 : vector<1x128xf32> to vector<8x128xf32>
    %70 = arith.subf %53, %69 : vector<8x128xf32>
    %cst_26 = arith.constant 9.99999974E-6 : f32
    %71 = vector.broadcast %cst_26 : f32 to vector<1x128xf32>
    %72 = arith.addf %68, %71 : vector<1x128xf32>
    %73 = math.rsqrt %72 : vector<1x128xf32>
    %74 = vector.broadcast %73 : vector<1x128xf32> to vector<8x128xf32>
    %75 = arith.mulf %70, %74 : vector<8x128xf32>
    %76 = vector.broadcast %46 : vector<1x128xf32> to vector<8x128xf32>
    %77 = arith.mulf %75, %76 : vector<8x128xf32>
    %78 = vector.broadcast %47 : vector<1x128xf32> to vector<8x128xf32>
    %79 = arith.addf %77, %78 : vector<8x128xf32>
    %c6 = arith.constant 6 : index
    %c0_27 = arith.constant 0 : index
    %80 = vector.load %arg2[%c6, %c0_27] : memref<7x128xf32, #tpu.memory_space<vmem>>, vector<1x128xf32>
    %81 = arith.truncf %79 : vector<8x128xf32> to vector<8x128xbf16>
    %c2_28 = arith.constant 2 : index
    %c0_29 = arith.constant 0 : index
    %c0_30 = arith.constant 0 : index
    %82 = vector.load %arg1[%c2_28, %c0_29, %c0_30] : memref<3x128x128xbf16, #tpu.memory_space<vmem>>, vector<1x128x128xbf16>
    %83 = vector.shape_cast %82 : vector<1x128x128xbf16> to vector<128x128xbf16>
    %cst_31 = arith.constant dense<0.000000e+00> : vector<8x128xf32>
    %84 = tpu.matmul %81, %83, %cst_31 {dimension_numbers = #tpu.dot_dimension_numbers<[1], [0], [0], [1], [0, 0, 1, 1], [], []>} : vector<8x128xbf16>, vector<128x128xbf16>, vector<8x128xf32> -> vector<8x128xf32>
    %85 = vector.broadcast %80 : vector<1x128xf32> to vector<8x128xf32>
    %86 = arith.addf %84, %85 : vector<8x128xf32>
    %c0_32 = arith.constant 0 : index
    %c0_33 = arith.constant 0 : index
    %87 = vector.load %arg3[%c0_32, %c0_33] : memref<8x128xf32, #tpu.memory_space<vmem>>, vector<8x128xf32>
    tpu.vector_store %arg3[%c0_32, %c0_33], %86 {strides = array<i32>} : memref<8x128xf32, #tpu.memory_space<vmem>>, vector<8x128xf32>,
    return
  }
}

</mosaic_0001>

<llo_original>
// kernel: mlp_vanilla_forward.1
$region0: #{mlp_vanilla_forward.1}
  #allocation0 [shape = 'u32[]', space=smem, size = 0x4, offset = 0x4, fixed_abs, tag = 'smem constant byte address 0x4 - core index']
  #allocation1 [shape = 'u32[144,128]{1,0:T(1,128)}', space=vmem, size = 0x12000, scoped, tag = 'internal scratch']
  %s0 = inlined_call_operand.vmem [shape: f32[8,128], index: 0, kind: input, shape index: {}]
  %s1 = inlined_call_operand.hbm [shape: bf16[3,128,128], index: 1, kind: input, shape index: {}]
  %s2 = inlined_call_operand.vmem [shape: f32[7,128], index: 2, kind: input, shape index: {}]
  %s3 = inlined_call_operand.vmem [shape: f32[8,128], index: 3, kind: output, shape index: {}]
  %s4 = sld [smem:[#allocation0]]
  $region26: #{mlp_vanilla_forward.1} parent=0
    _
  %s6 = ssub.s32 1, %s4
  %s7 = scalar_select 0, %s6, %s4
  $region1: #{mlp_vanilla_forward.1} parent=0
    #allocation2 [shape = 'u8[98304]{0}', space=vmem, size = 0x18000, scoped, tag = 'input window, operand 1, single buffered']
    #allocation3 [shape = 's32[1]{0}', space=sflag, size = 0x4, scoped, tag = 'scoped memory for mlp_vanilla_forward.1']
    %8 = vsyncpa [#allocation3], 0
    // Predicated region
    $region2: #{mlp_vanilla_forward.1} parent=1 // pred_check
      _
    $region3: #{mlp_vanilla_forward.1} parent=1 // pred_check_branch
      %10 = sbr.rel (0) target = $region5
    $region4: #{mlp_vanilla_forward.1} parent=1 // pred_region
      _
    $region5: #{mlp_vanilla_forward.1} parent=1 // pred_fallthru
      _
    // Predicated region
    $region6: #{mlp_vanilla_forward.1} parent=1 // pred_check
      _
    $region7: #{mlp_vanilla_forward.1} parent=1 // pred_check_branch
      %12 = sbr.rel (0) target = $region9
    $region8: #{mlp_vanilla_forward.1} parent=1 // pred_region
      %s14 = ssub.s32 3072, 3072
      %15 = vsyncadd [#allocation3], %s14
      %s16 = sshll.u32 [#allocation2], 4
      %s17 = int_to_ptr.vmem [resolvable:$true] %s16
      %22 = dma.hbm_to_vmem [thread:$0]  %s1, 3072, %s17, [#allocation3], 64, 64, 4
    $region9: #{mlp_vanilla_forward.1} parent=1 // pred_fallthru
      _
    // Predicated region
    $region10: #{mlp_vanilla_forward.1} parent=1 // pred_check
      _
    $region11: #{mlp_vanilla_forward.1} parent=1 // pred_check_branch
      %24 = sbr.rel (0) target = $region13
    $region12: #{mlp_vanilla_forward.1} parent=1 // pred_region
      _
    $region13: #{mlp_vanilla_forward.1} parent=1 // pred_fallthru
      _
    // Predicated region
    $region14: #{mlp_vanilla_forward.1} parent=1 // pred_check
      _
    $region15: #{mlp_vanilla_forward.1} parent=1 // pred_check_branch
      %26 = sbr.rel (0) target = $region17
    $region16: #{mlp_vanilla_forward.1} parent=1 // pred_region
      %27 = dma.done [#allocation3], 3072
    $region17: #{mlp_vanilla_forward.1} parent=1 // pred_fallthru
      _
    %v29 = vld [vmem:[%s0] sm:$0xff]
    %v30 = vlaneseq
    %v31 = vshrl.u32 %v30, 7
    %vm32 = vcmp.lt.s32.totalorder %v31, 8
    %v33 = vsel %vm32, 1, 0
    %v34 = vcvt.s32.f32 %v33
    %v35 = vld [vmem:[#allocation2] sm:$0xf]
    %v36 = vld [vmem:[#allocation2 + $0x4] sm:$0xf]
    %v37 = vld [vmem:[#allocation2 + $0x8] sm:$0xf]
    %v38 = vld [vmem:[#allocation2 + $0xc] sm:$0xf]
    %v39 = vld [vmem:[#allocation2 + $0x10] sm:$0xf]
    %v40 = vld [vmem:[#allocation2 + $0x14] sm:$0xf]
    %v41 = vld [vmem:[#allocation2 + $0x18] sm:$0xf]
    %v42 = vld [vmem:[#allocation2 + $0x1c] sm:$0xf]
    %v43 = vld [vmem:[#allocation2 + $0x20] sm:$0xf]
    %v44 = vld [vmem:[#allocation2 + $0x24] sm:$0xf]
    %v45 = vld [vmem:[#allocation2 + $0x28] sm:$0xf]
    %v46 = vld [vmem:[#allocation2 + $0x2c] sm:$0xf]
    %v47 = vld [vmem:[#allocation2 + $0x30] sm:$0xf]
    %v48 = vld [vmem:[#allocation2 + $0x34] sm:$0xf]
    %v49 = vld [vmem:[#allocation2 + $0x38] sm:$0xf]
    %v50 = vld [vmem:[#allocation2 + $0x3c] sm:$0xf]
    %v51 = vld [vmem:[%s2] sm:$0x1]
    %v52 = vld [vmem:[%s2 + $0x1] sm:$0x1]
    %v53 = vld [vmem:[%s2 + $0x2] sm:$0x1]
    %v54 = vpack.c.bf16 %v29, %v29
    %v55 = vlaneseq
    %v56 = vshrl.u32 %v55, 7
    %v57 = vsub.s32 0, %v56
    %v58 = vrot.slane %v51, %v57
    %v75 = vunpack.c.l.b16 %v35
    %v76 = vunpack.c.l.b16 %v36
    %v77 = vunpack.c.l.b16 %v37
    %v78 = vunpack.c.l.b16 %v38
    %v79 = vunpack.c.l.b16 %v39
    %v80 = vunpack.c.l.b16 %v40
    %v81 = vunpack.c.l.b16 %v41
    %v82 = vunpack.c.l.b16 %v42
    %v83 = vunpack.c.l.b16 %v43
    %v84 = vunpack.c.l.b16 %v44
    %v85 = vunpack.c.l.b16 %v45
    %v86 = vunpack.c.l.b16 %v46
    %v87 = vunpack.c.l.b16 %v47
    %v88 = vunpack.c.l.b16 %v48
    %v89 = vunpack.c.l.b16 %v49
    %v90 = vunpack.c.l.b16 %v50
    %v91 = vpack.c.b16 %v76, %v75
    %v92 = vpack.c.b16 %v78, %v77
    %v93 = vpack.c.b16 %v80, %v79
    %v94 = vpack.c.b16 %v82, %v81
    %v95 = vpack.c.b16 %v84, %v83
    %v96 = vpack.c.b16 %v86, %v85
    %v97 = vpack.c.b16 %v88, %v87
    %v98 = vpack.c.b16 %v90, %v89
    %107 = vmatprep.subr.bf16.mxu0 0
    %108 = vmatpush1.bf16.msra.mxu0 %v98
    %109 = vmatprep.subr.bf16.mxu0 0
    %110 = vmatpush1.bf16.msra.mxu0 %v97
    %111 = vmatprep.subr.bf16.mxu0 0
    %112 = vmatpush1.bf16.msra.mxu0 %v96
    %113 = vmatprep.subr.bf16.mxu0 0
    %114 = vmatpush1.bf16.msra.mxu0 %v95
    %115 = vmatprep.subr.bf16.mxu0 0
    %116 = vmatpush1.bf16.msra.mxu0 %v94
    %117 = vmatprep.subr.bf16.mxu0 0
    %118 = vmatpush1.bf16.msra.mxu0 %v93
    %119 = vmatprep.subr.bf16.mxu0 0
    %120 = vmatpush1.bf16.msra.mxu0 %v92
    %121 = vmatprep.subr.bf16.mxu0 0
    %122 = vmatpush1.bf16.msra.mxu0 %v91
    %123 = vmatprep.subr.bf16.mxu0 0
    %124 = vmatpush2.bf16.msra.mxu0 0
    %125 = vmatprep.subr.bf16.mxu0 0
    %126 = vmatpush2.bf16.msra.mxu0 0
    %127 = vmatprep.subr.bf16.mxu0 0
    %128 = vmatpush2.bf16.msra.mxu0 0
    %129 = vmatprep.subr.bf16.mxu0 0
    %130 = vmatpush2.bf16.msra.mxu0 0
    %131 = vmatprep.subr.bf16.mxu0 0
    %132 = vmatpush2.bf16.msra.mxu0 0
    %133 = vmatprep.subr.bf16.mxu0 0
    %134 = vmatpush2.bf16.msra.mxu0 0
    %135 = vmatprep.subr.bf16.mxu0 0
    %136 = vmatpush2.bf16.msra.mxu0 0
    %137 = vmatprep.subr.bf16.mxu0 0
    %138 = vmatpush2.bf16.msra.mxu0 0
    %139 = vmatprep.mubr.bf16.mxu0 0
    %140 = vmatmul.mubr.bf16.gmra.mxu0 %v54
    %v141 = vpop.f32.mrf.mxu0
    %v142 = vadd.f32 %v58, %v141
    %v143 = vpop.f32.mrf.mxu0
    %v144 = vpop.f32.mrf.mxu0
    %v145 = vpop.f32.mrf.mxu0
    %146 = vdwg.mxu0
    %v147 = vmax.f32 %v142, 0.0
    %v148 = vmul.f32 %v147, %v34
    %v149 = vrot.slane %v148, 4
    %v150 = vadd.f32 %v148, %v149
    %v151 = vrot.slane %v150, 2
    %v152 = vadd.f32 %v150, %v151
    %v153 = vrot.slane %v152, 1
    %v154 = vadd.f32 %v152, %v153
    %v155 = vmul.f32 %v154, 0.125
    %v156 = vsub.f32 %v147, %v155
    %v157 = vmul.f32 %v156, %v34
    %v158 = vmul.f32 %v157, %v157
    %v159 = vrot.slane %v158, 4
    %v160 = vadd.f32 %v158, %v159
    %v161 = vrot.slane %v160, 2
    %v162 = vadd.f32 %v160, %v161
    %v163 = vrot.slane %v162, 1
    %v164 = vadd.f32 %v162, %v163
    %v165 = vmul.f32 %v164, 0.125
    %v166 = vadd.f32 %v165, 1e-05
    %v167 = vrsqrt.pop %v166
    %v168 = vmul.f32 %v156, %v167
    %v169 = vlaneseq
    %v170 = vshrl.u32 %v169, 7
    %v171 = vsub.s32 0, %v170
    %v172 = vrot.slane %v52, %v171
    %v173 = vmul.f32 %v168, %v172
    %v174 = vlaneseq
    %v175 = vshrl.u32 %v174, 7
    %v176 = vsub.s32 0, %v175
    %v177 = vrot.slane %v53, %v176
    %v178 = vadd.f32 %v173, %v177
    %s179 = scalar_lea.vmem [#allocation2], 64
    %v180 = vld [vmem:[%s179] sm:$0xf]
    %v181 = vld [vmem:[%s179 + $0x4] sm:$0xf]
    %v182 = vld [vmem:[%s179 + $0x8] sm:$0xf]
    %v183 = vld [vmem:[%s179 + $0xc] sm:$0xf]
    %v184 = vld [vmem:[%s179 + $0x10] sm:$0xf]
    %v185 = vld [vmem:[%s179 + $0x14] sm:$0xf]
    %v186 = vld [vmem:[%s179 + $0x18] sm:$0xf]
    %v187 = vld [vmem:[%s179 + $0x1c] sm:$0xf]
    %v188 = vld [vmem:[%s179 + $0x20] sm:$0xf]
    %v189 = vld [vmem:[%s179 + $0x24] sm:$0xf]
    %v190 = vld [vmem:[%s179 + $0x28] sm:$0xf]
    %v191 = vld [vmem:[%s179 + $0x2c] sm:$0xf]
    %v192 = vld [vmem:[%s179 + $0x30] sm:$0xf]
    %v193 = vld [vmem:[%s179 + $0x34] sm:$0xf]
    %v194 = vld [vmem:[%s179 + $0x38] sm:$0xf]
    %v195 = vld [vmem:[%s179 + $0x3c] sm:$0xf]
    %v196 = vld [vmem:[%s2 + $0x3] sm:$0x1]
    %v197 = vld [vmem:[%s2 + $0x4] sm:$0x1]
    %v198 = vld [vmem:[%s2 + $0x5] sm:$0x1]
    %v199 = vpack.c.bf16 %v178, %v178
    %v200 = vlaneseq
    %v201 = vshrl.u32 %v200, 7
    %v202 = vsub.s32 0, %v201
    %v203 = vrot.slane %v196, %v202
    %v220 = vunpack.c.l.b16 %v180
    %v221 = vunpack.c.l.b16 %v181
    %v222 = vunpack.c.l.b16 %v182
    %v223 = vunpack.c.l.b16 %v183
    %v224 = vunpack.c.l.b16 %v184
    %v225 = vunpack.c.l.b16 %v185
    %v226 = vunpack.c.l.b16 %v186
    %v227 = vunpack.c.l.b16 %v187
    %v228 = vunpack.c.l.b16 %v188
    %v229 = vunpack.c.l.b16 %v189
    %v230 = vunpack.c.l.b16 %v190
    %v231 = vunpack.c.l.b16 %v191
    %v232 = vunpack.c.l.b16 %v192
    %v233 = vunpack.c.l.b16 %v193
    %v234 = vunpack.c.l.b16 %v194
    %v235 = vunpack.c.l.b16 %v195
    %v236 = vpack.c.b16 %v221, %v220
    %v237 = vpack.c.b16 %v223, %v222
    %v238 = vpack.c.b16 %v225, %v224
    %v239 = vpack.c.b16 %v227, %v226
    %v240 = vpack.c.b16 %v229, %v228
    %v241 = vpack.c.b16 %v231, %v230
    %v242 = vpack.c.b16 %v233, %v232
    %v243 = vpack.c.b16 %v235, %v234
    %252 = vmatprep.subr.bf16.mxu0 0
    %253 = vmatpush1.bf16.msra.mxu0 %v243
    %254 = vmatprep.subr.bf16.mxu0 0
    %255 = vmatpush1.bf16.msra.mxu0 %v242
    %256 = vmatprep.subr.bf16.mxu0 0
    %257 = vmatpush1.bf16.msra.mxu0 %v241
    %258 = vmatprep.subr.bf16.mxu0 0
    %259 = vmatpush1.bf16.msra.mxu0 %v240
    %260 = vmatprep.subr.bf16.mxu0 0
    %261 = vmatpush1.bf16.msra.mxu0 %v239
    %262 = vmatprep.subr.bf16.mxu0 0
    %263 = vmatpush1.bf16.msra.mxu0 %v238
    %264 = vmatprep.subr.bf16.mxu0 0
    %265 = vmatpush1.bf16.msra.mxu0 %v237
    %266 = vmatprep.subr.bf16.mxu0 0
    %267 = vmatpush1.bf16.msra.mxu0 %v236
    %268 = vmatprep.subr.bf16.mxu0 0
    %269 = vmatpush2.bf16.msra.mxu0 0
    %270 = vmatprep.subr.bf16.mxu0 0
    %271 = vmatpush2.bf16.msra.mxu0 0
    %272 = vmatprep.subr.bf16.mxu0 0
    %273 = vmatpush2.bf16.msra.mxu0 0
    %274 = vmatprep.subr.bf16.mxu0 0
    %275 = vmatpush2.bf16.msra.mxu0 0
    %276 = vmatprep.subr.bf16.mxu0 0
    %277 = vmatpush2.bf16.msra.mxu0 0
    %278 = vmatprep.subr.bf16.mxu0 0
    %279 = vmatpush2.bf16.msra.mxu0 0
    %280 = vmatprep.subr.bf16.mxu0 0
    %281 = vmatpush2.bf16.msra.mxu0 0
    %282 = vmatprep.subr.bf16.mxu0 0
    %283 = vmatpush2.bf16.msra.mxu0 0
    %284 = vmatprep.mubr.bf16.mxu0 0
    %285 = vmatmul.mubr.bf16.gmra.mxu0 %v199
    %v286 = vpop.f32.mrf.mxu0
    %v287 = vadd.f32 %v203, %v286
    %v288 = vpop.f32.mrf.mxu0
    %v289 = vpop.f32.mrf.mxu0
    %v290 = vpop.f32.mrf.mxu0
    %291 = vdwg.mxu0
    %v292 = vmax.f32 %v287, 0.0
    %v293 = vmul.f32 %v292, %v34
    %v294 = vrot.slane %v293, 4
    %v295 = vadd.f32 %v293, %v294
    %v296 = vrot.slane %v295, 2
    %v297 = vadd.f32 %v295, %v296
    %v298 = vrot.slane %v297, 1
    %v299 = vadd.f32 %v297, %v298
    %v300 = vmul.f32 %v299, 0.125
    %v301 = vsub.f32 %v292, %v300
    %v302 = vmul.f32 %v301, %v34
    %v303 = vmul.f32 %v302, %v302
    %v304 = vrot.slane %v303, 4
    %v305 = vadd.f32 %v303, %v304
    %v306 = vrot.slane %v305, 2
    %v307 = vadd.f32 %v305, %v306
    %v308 = vrot.slane %v307, 1
    %v309 = vadd.f32 %v307, %v308
    %v310 = vmul.f32 %v309, 0.125
    %v311 = vadd.f32 %v310, 1e-05
    %v312 = vrsqrt.pop %v311
    %v313 = vmul.f32 %v301, %v312
    %v314 = vlaneseq
    %v315 = vshrl.u32 %v314, 7
    %v316 = vsub.s32 0, %v315
    %v317 = vrot.slane %v197, %v316
    %v318 = vmul.f32 %v313, %v317
    %v319 = vlaneseq
    %v320 = vshrl.u32 %v319, 7
    %v321 = vsub.s32 0, %v320
    %v322 = vrot.slane %v198, %v321
    %v323 = vadd.f32 %v318, %v322
    %v324 = vld [vmem:[%s2 + $0x6] sm:$0x1]
    %v325 = vpack.c.bf16 %v323, %v323
    %s326 = scalar_lea.vmem [#allocation2], 128
    %v327 = vld [vmem:[%s326] sm:$0xf]
    %v328 = vld [vmem:[%s326 + $0x4] sm:$0xf]
    %v329 = vld [vmem:[%s326 + $0x8] sm:$0xf]
    %v330 = vld [vmem:[%s326 + $0xc] sm:$0xf]
    %v331 = vld [vmem:[%s326 + $0x10] sm:$0xf]
    %v332 = vld [vmem:[%s326 + $0x14] sm:$0xf]
    %v333 = vld [vmem:[%s326 + $0x18] sm:$0xf]
    %v334 = vld [vmem:[%s326 + $0x1c] sm:$0xf]
    %v335 = vld [vmem:[%s326 + $0x20] sm:$0xf]
    %v336 = vld [vmem:[%s326 + $0x24] sm:$0xf]
    %v337 = vld [vmem:[%s326 + $0x28] sm:$0xf]
    %v338 = vld [vmem:[%s326 + $0x2c] sm:$0xf]
    %v339 = vld [vmem:[%s326 + $0x30] sm:$0xf]
    %v340 = vld [vmem:[%s326 + $0x34] sm:$0xf]
    %v341 = vld [vmem:[%s326 + $0x38] sm:$0xf]
    %v342 = vld [vmem:[%s326 + $0x3c] sm:$0xf]
    %v343 = vlaneseq
    %v344 = vshrl.u32 %v343, 7
    %v345 = vsub.s32 0, %v344
    %v346 = vrot.slane %v324, %v345
    %v363 = vunpack.c.l.b16 %v327
    %v364 = vunpack.c.l.b16 %v328
    %v365 = vunpack.c.l.b16 %v329
    %v366 = vunpack.c.l.b16 %v330
    %v367 = vunpack.c.l.b16 %v331
    %v368 = vunpack.c.l.b16 %v332
    %v369 = vunpack.c.l.b16 %v333
    %v370 = vunpack.c.l.b16 %v334
    %v371 = vunpack.c.l.b16 %v335
    %v372 = vunpack.c.l.b16 %v336
    %v373 = vunpack.c.l.b16 %v337
    %v374 = vunpack.c.l.b16 %v338
    %v375 = vunpack.c.l.b16 %v339
    %v376 = vunpack.c.l.b16 %v340
    %v377 = vunpack.c.l.b16 %v341
    %v378 = vunpack.c.l.b16 %v342
    %v379 = vpack.c.b16 %v364, %v363
    %v380 = vpack.c.b16 %v366, %v365
    %v381 = vpack.c.b16 %v368, %v367
    %v382 = vpack.c.b16 %v370, %v369
    %v383 = vpack.c.b16 %v372, %v371
    %v384 = vpack.c.b16 %v374, %v373
    %v385 = vpack.c.b16 %v376, %v375
    %v386 = vpack.c.b16 %v378, %v377
    %395 = vmatprep.subr.bf16.mxu0 0
    %396 = vmatpush1.bf16.msra.mxu0 %v386
    %397 = vmatprep.subr.bf16.mxu0 0
    %398 = vmatpush1.bf16.msra.mxu0 %v385
    %399 = vmatprep.subr.bf16.mxu0 0
    %400 = vmatpush1.bf16.msra.mxu0 %v384
    %401 = vmatprep.subr.bf16.mxu0 0
    %402 = vmatpush1.bf16.msra.mxu0 %v383
    %403 = vmatprep.subr.bf16.mxu0 0
    %404 = vmatpush1.bf16.msra.mxu0 %v382
    %405 = vmatprep.subr.bf16.mxu0 0
    %406 = vmatpush1.bf16.msra.mxu0 %v381
    %407 = vmatprep.subr.bf16.mxu0 0
    %408 = vmatpush1.bf16.msra.mxu0 %v380
    %409 = vmatprep.subr.bf16.mxu0 0
    %410 = vmatpush1.bf16.msra.mxu0 %v379
    %411 = vmatprep.subr.bf16.mxu0 0
    %412 = vmatpush2.bf16.msra.mxu0 0
    %413 = vmatprep.subr.bf16.mxu0 0
    %414 = vmatpush2.bf16.msra.mxu0 0
    %415 = vmatprep.subr.bf16.mxu0 0
    %416 = vmatpush2.bf16.msra.mxu0 0
    %417 = vmatprep.subr.bf16.mxu0 0
    %418 = vmatpush2.bf16.msra.mxu0 0
    %419 = vmatprep.subr.bf16.mxu0 0
    %420 = vmatpush2.bf16.msra.mxu0 0
    %421 = vmatprep.subr.bf16.mxu0 0
    %422 = vmatpush2.bf16.msra.mxu0 0
    %423 = vmatprep.subr.bf16.mxu0 0
    %424 = vmatpush2.bf16.msra.mxu0 0
    %425 = vmatprep.subr.bf16.mxu0 0
    %426 = vmatpush2.bf16.msra.mxu0 0
    %427 = vmatprep.mubr.bf16.mxu0 0
    %428 = vmatmul.mubr.bf16.gmra.mxu0 %v325
    %v429 = vpop.f32.mrf.mxu0
    %v430 = vadd.f32 %v346, %v429
    %v431 = vpop.f32.mrf.mxu0
    %v432 = vpop.f32.mrf.mxu0
    %v433 = vpop.f32.mrf.mxu0
    %434 = vdwg.mxu0
    %435 = vst [vmem:[%s3] sm:$0xff] %v430
    // Predicated region
    $region18: #{mlp_vanilla_forward.1} parent=1 // pred_check
      _
    $region19: #{mlp_vanilla_forward.1} parent=1 // pred_check_branch
      %437 = sbr.rel (0) target = $region21
    $region20: #{mlp_vanilla_forward.1} parent=1 // pred_region
      _
    $region21: #{mlp_vanilla_forward.1} parent=1 // pred_fallthru
      _
    // Predicated region
    $region22: #{mlp_vanilla_forward.1} parent=1 // pred_check
      _
    $region23: #{mlp_vanilla_forward.1} parent=1 // pred_check_branch
      %439 = sbr.rel (0) target = $region25
    $region24: #{mlp_vanilla_forward.1} parent=1 // pred_region
      _
    $region25: #{mlp_vanilla_forward.1} parent=1 // pred_fallthru
      _
    %440 = vsyncpa [#allocation3], 1

</llo_original>
